<compile_context>
chip_gen: v5e
topology: v5e:2x2
jax: 0.10.0
libtpu: 0.0.40
codegen_flags: <defaults>
</compile_context>

<pallas_src>
import jax
import jax.numpy as jnp
from jax.experimental import pallas as pl
from jax.experimental.pallas import tpu as pltpu


def _normalize_kernel(img_ref, sb_ref, out_ref):
    # img_ref / out_ref: (TILE_R, TILE_L) lane-dense tile
    # sb_ref: (TILE_R, 2) per-row [scale, bias] constants (f32)
    x = img_ref[...].astype(jnp.float32)
    scale = sb_ref[:, 0:1]  # (TILE_R, 1), broadcasts over lanes
    bias = sb_ref[:, 1:2]   # (TILE_R, 1)
    out_ref[...] = (x * scale + bias).astype(out_ref.dtype)


def _tpu_generation():
    try:
        kind = jax.devices()[0].device_kind.lower()
    except Exception:
        return None
    for gen in ("v7", "v6", "v5"):
        if gen in kind:
            return gen
    return None


def _tile_budget():
    """(target_bytes per input tile, vmem_limit_bytes or None) per TPU gen."""
    gen = _tpu_generation()
    if gen == "v7":
        # 3.2 TB/s HBM: amortize the ~0.35us/step overhead; stay < 64 MiB VMEM.
        return 6 * 1024 * 1024, 48 << 20
    if gen == "v6":
        return 4 * 1024 * 1024, None
    # v5e (16 MiB default scoped VMEM) and unknown chips: conservative.
    return 2 * 1024 * 1024, None


def _sublane_pack(itemsize):
    # Rows per sublane-group for packed dtypes.
    return {4: 8, 2: 16, 1: 32}.get(itemsize, 8)


def _choose_tiles(rows, cols, itemsize, target_bytes):
    """Pick (tile_r, tile_l) so one input tile is ~target_bytes.

    tile_l is a multiple of 128 (or the full column extent); tile_r is a
    multiple of the dtype's sublane packing (or the full row extent).
    Guarantees >= 2 total grid steps whenever rows allow it (megacore).
    """
    pack = _sublane_pack(itemsize)

    # Lane (column) tiling: only when one full row exceeds the budget and the
    # column count is 128-aligned (otherwise the block must span full cols).
    row_bytes = cols * itemsize
    if row_bytes > target_bytes and cols % 128 == 0:
        tile_l = max(128, (target_bytes // itemsize // 128) * 128)
        tile_l = min(tile_l, cols)
    else:
        tile_l = cols

    # Row tiling: fill the remaining budget.
    if rows <= pack:
        tile_r = rows
    else:
        tile_r = max(1, target_bytes // (tile_l * itemsize))
        tile_r = min(tile_r, rows)
        tile_r = max(pack, (tile_r // pack) * pack)

    # Megacore: ensure >= 2 grid steps when possible so the parallel axes
    # shard across v7x's two TensorCores.
    grid_steps = pl.cdiv(rows, tile_r) * pl.cdiv(cols, tile_l)
    if grid_steps < 2 and rows > pack:
        half = -(-rows // 2)                      # ceil(rows / 2)
        tile_r = max(pack, -(-half // pack) * pack)  # round up to packing

    return int(tile_r), int(tile_l)


def normalization(img, mean, std):
    """(img - mean) / std with mean/std of shape (C, 1, 1), img of (N, C, H, W)."""
    N, C, H, W = img.shape
    assert mean.shape == (C, 1, 1) and std.shape == (C, 1, 1)

    R, L = N * C, H * W
    img2d = img.reshape(R, L)

    # Per-channel constants fused into one (R, 2) [scale, bias] array, f32.
    scale_c = (1.0 / std.reshape(C)).astype(jnp.float32)       # 1 / std
    bias_c = (-mean.reshape(C).astype(jnp.float32)) * scale_c   # -mean / std
    sb_c = jnp.stack([scale_c, bias_c], axis=-1)                # (C, 2)
    sb_rows = jnp.tile(sb_c, (N, 1))                            # (R, 2); row r -> channel r % C

    itemsize = jnp.dtype(img.dtype).itemsize
    target_bytes, vmem_limit = _tile_budget()
    tile_r, tile_l = _choose_tiles(R, L, itemsize, target_bytes)
    grid = (pl.cdiv(R, tile_r), pl.cdiv(L, tile_l))

    cost = pl.CostEstimate(
        flops=2 * R * L,
        transcendentals=0,
        bytes_accessed=2 * R * L * itemsize + R * 2 * 4,
    )

    compiler_params = pltpu.CompilerParams(
        dimension_semantics=("parallel", "parallel"),
        vmem_limit_bytes=vmem_limit,
    )

    out2d = pl.pallas_call(
        _normalize_kernel,
        out_shape=jax.ShapeDtypeStruct((R, L), img.dtype),
        grid_spec=pltpu.PrefetchScalarGridSpec(
            num_scalar_prefetch=0,
            grid=grid,
            in_specs=[
                pl.BlockSpec((tile_r, tile_l), lambda i, j: (i, j)),
                pl.BlockSpec((tile_r, 2), lambda i, j: (i, 0)),
            ],
            out_specs=pl.BlockSpec((tile_r, tile_l), lambda i, j: (i, j)),
        ),
        compiler_params=compiler_params,
        cost_estimate=cost,
    )(img2d, sb_rows)

    return out2d.reshape(N, C, H, W)


if __name__ == "__main__":
    key = jax.random.PRNGKey(0)
    N, C, H, W = 2, 3, 16, 16

    img = jax.random.uniform(key, (N, C, H, W), dtype=jnp.float32)

    # Deterministic parameters (ImageNet-style constants), shaped (C, 1, 1)
    # exactly like torch.tensor(mean).view(-1, 1, 1).
    mean = jnp.array([0.485, 0.456, 0.406], dtype=jnp.float32).reshape(-1, 1, 1)
    std = jnp.array([0.229, 0.224, 0.225], dtype=jnp.float32).reshape(-1, 1, 1)

    out = normalization(img, mean, std)
    out = jax.block_until_ready(out)

    # Sanity check against plain JAX broadcasting semantics (matches PyTorch).
    ref = (img - mean) / std
    assert out.shape == (N, C, H, W)
    assert jnp.allclose(out, ref, atol=1e-5, rtol=1e-5), "mismatch vs reference"

    print("KERNEL_OK")
</pallas_src>

<mosaic_0001>
module attributes {stable_mosaic.version = 11 : i64} {
  func.func @_normalize_kernel(%arg0: i32, %arg1: i32, %arg2: memref<6x256xf32, #tpu.memory_space<vmem>>, %arg3: memref<6x2xf32, #tpu.memory_space<vmem>>, %arg4: memref<6x256xf32, #tpu.memory_space<vmem>>) attributes {dimension_semantics = [#tpu.dimension_semantics<parallel>, #tpu.dimension_semantics<parallel>], iteration_bounds = array<i64: 1, 1>, scalar_prefetch = 0 : i64, scratch_operands = 0 : i64, tpu.core_type = #tpu.core_type<tc>, window_params = [{transform_indices = @transform_0, window_bounds = array<i64: 6, 256>}, {transform_indices = @transform_1, window_bounds = array<i64: 6, 2>}, {transform_indices = @transform_2, window_bounds = array<i64: 6, 256>}]} {
    %c0 = arith.constant 0 : index
    %c0_0 = arith.constant 0 : index
    %0 = vector.load %arg2[%c0, %c0_0] : memref<6x256xf32, #tpu.memory_space<vmem>>, vector<6x256xf32>
    %c0_1 = arith.constant 0 : index
    %c0_2 = arith.constant 0 : index
    %1 = vector.load %arg3[%c0_1, %c0_2] : memref<6x2xf32, #tpu.memory_space<vmem>>, vector<6x1xf32>
    %c0_3 = arith.constant 0 : index
    %c1 = arith.constant 1 : index
    %2 = vector.load %arg3[%c0_3, %c1] : memref<6x2xf32, #tpu.memory_space<vmem>>, vector<6x1xf32>
    %3 = vector.broadcast %1 : vector<6x1xf32> to vector<6x256xf32>
    %4 = arith.mulf %0, %3 : vector<6x256xf32>
    %5 = vector.broadcast %2 : vector<6x1xf32> to vector<6x256xf32>
    %6 = arith.addf %4, %5 : vector<6x256xf32>
    %c0_4 = arith.constant 0 : index
    %c0_5 = arith.constant 0 : index
    %7 = vector.load %arg4[%c0_4, %c0_5] : memref<6x256xf32, #tpu.memory_space<vmem>>, vector<6x256xf32>
    tpu.vector_store %arg4[%c0_4, %c0_5], %6 {strides = array<i32>} : memref<6x256xf32, #tpu.memory_space<vmem>>, vector<6x256xf32>,
    return
  }
  func.func @transform_0(%arg0: i32, %arg1: i32) -> (i32, i32) {
    %c0_i32 = arith.constant 0 : i32
    return %arg0, %arg1 : i32, i32
  }
  func.func @transform_1(%arg0: i32, %arg1: i32) -> (i32, i32) {
    %c0_i32 = arith.constant 0 : i32
    %c0_i32_0 = arith.constant 0 : i32
    return %arg0, %c0_i32 : i32, i32
  }
  func.func @transform_2(%arg0: i32, %arg1: i32) -> (i32, i32) {
    %c0_i32 = arith.constant 0 : i32
    return %arg0, %arg1 : i32, i32
  }
}

</mosaic_0001>

<llo_original>
// kernel: tpu_custom_call.1
$region0: #{tpu_custom_call.1}
  #allocation0 [shape = 'u32[]', space=smem, size = 0x4, offset = 0x4, fixed_abs, tag = 'smem constant byte address 0x4 - core index']
  #allocation1 [shape = 'u32[72,128]{1,0:T(1,128)}', space=vmem, size = 0x9000, scoped, tag = 'internal scratch']
  %s0 = inlined_call_operand.hbm [shape: f32[6,256], index: 0, kind: input, shape index: {}]
  %s1 = inlined_call_operand.vmem [shape: f32[6,2], index: 1, kind: input, shape index: {}]
  %s2 = inlined_call_operand.hbm [shape: f32[6,256], index: 2, kind: output, shape index: {}]
  %s3 = sld [smem:[#allocation0]]
  $region22: #{tpu_custom_call.1} parent=0
    _
  %s5 = ssub.s32 1, %s3
  %s6 = scalar_select 0, %s5, %s3
  $region1: #{tpu_custom_call.1} parent=0
    #allocation2 [shape = 'u8[8192]{0}', space=vmem, size = 0x2000, scoped, tag = 'input window, operand 0, single buffered']
    #allocation3 [shape = 's32[1]{0}', space=sflag, size = 0x4, scoped, tag = 'scoped memory for tpu_custom_call.1']
    #allocation4 [shape = 's32[1]{0}', space=sflag, size = 0x4, scoped, tag = 'scoped memory for tpu_custom_call.1']
    #allocation5 [shape = 'u8[8192]{0}', space=vmem, size = 0x2000, scoped, tag = 'output window, operand 0, single buffered']
    %7 = vsyncpa [#allocation3], 0
    %8 = vsyncpa [#allocation4], 0
    // Predicated region
    $region2: #{tpu_custom_call.1} parent=1 // pred_check
      _
    $region3: #{tpu_custom_call.1} parent=1 // pred_check_branch
      %10 = sbr.rel (0) target = $region5
    $region4: #{tpu_custom_call.1} parent=1 // pred_region
      %12 = vsyncadd [#allocation3], 0
      %s14 = sshll.u32 %s0, 4
      %s15 = int_to_ptr.hbm [resolvable:$true] %s14
      %s16 = sshll.u32 [#allocation2], 4
      %s17 = int_to_ptr.vmem [resolvable:$true] %s16
      %19 = dma.hbm_to_vmem [thread:$0]  %s15, 256, %s17, [#allocation3]
    $region5: #{tpu_custom_call.1} parent=1 // pred_fallthru
      _
    // Predicated region
    $region6: #{tpu_custom_call.1} parent=1 // pred_check
      _
    $region7: #{tpu_custom_call.1} parent=1 // pred_check_branch
      %21 = sbr.rel (0) target = $region9
    $region8: #{tpu_custom_call.1} parent=1 // pred_region
      _
    $region9: #{tpu_custom_call.1} parent=1 // pred_fallthru
      _
    // Predicated region
    $region10: #{tpu_custom_call.1} parent=1 // pred_check
      _
    $region11: #{tpu_custom_call.1} parent=1 // pred_check_branch
      %23 = sbr.rel (0) target = $region13
    $region12: #{tpu_custom_call.1} parent=1 // pred_region
      %25 = dma.done [#allocation3], 256
    $region13: #{tpu_custom_call.1} parent=1 // pred_fallthru
      _
    %v26 = vld [vmem:[#allocation2] sm:$0x3f]
    %v27 = vld [vmem:[#allocation2 + $0x8] sm:$0x3f]
    %v28 = vld [vmem:[%s1] sm:$0x3f]
    %30 = vset.pattern.permute.xlu0 0
    %31 = vperm.xlu0 %30, %v28
    %v32 = vpop.permute.xlu0 %31
    %v34 = vmul.f32 %v26, %v32
    %v35 = vmul.f32 %v27, %v32
    %36 = vset.pattern.permute.xlu0 1
    %37 = vperm.xlu0 %36, %v28
    %v38 = vpop.permute.xlu0 %37
    %v40 = vadd.f32 %v34, %v38
    %v41 = vadd.f32 %v35, %v38
    %42 = vst [vmem:[#allocation5] sm:$0x3f] %v40
    %43 = vst [vmem:[#allocation5 + $0x8] sm:$0x3f] %v41
    // Predicated region
    $region14: #{tpu_custom_call.1} parent=1 // pred_check
      _
    $region15: #{tpu_custom_call.1} parent=1 // pred_check_branch
      %45 = sbr.rel (0) target = $region17
    $region16: #{tpu_custom_call.1} parent=1 // pred_region
      %47 = vsyncadd [#allocation4], 0
      %s49 = sshll.u32 [#allocation5], 4
      %s50 = int_to_ptr.vmem [resolvable:$true] %s49
      %s51 = sshll.u32 %s2, 4
      %s52 = int_to_ptr.hbm [resolvable:$true] %s51
      %54 = dma.vmem_to_hbm [thread:$0]  %s50, 256, %s52, [#allocation4]
    $region17: #{tpu_custom_call.1} parent=1 // pred_fallthru
      _
    // Predicated region
    $region18: #{tpu_custom_call.1} parent=1 // pred_check
      _
    $region19: #{tpu_custom_call.1} parent=1 // pred_check_branch
      %56 = sbr.rel (0) target = $region21
    $region20: #{tpu_custom_call.1} parent=1 // pred_region
      %58 = dma.done [#allocation4], 256
    $region21: #{tpu_custom_call.1} parent=1 // pred_fallthru
      _
    %59 = vsyncpa [#allocation3], 1
    %60 = vsyncpa [#allocation4], 1

</llo_original>
